<compile_context>
chip_gen: v7x
topology: tpu7x:2x2x1
jax: 0.10.0
libtpu: 0.0.40
codegen_flags: <defaults>
</compile_context>

<pallas_src>
import functools
import math

import jax
import jax.numpy as jnp
from jax import lax
from jax.experimental import pallas as pl
from jax.experimental.pallas import tpu as pltpu

LN_EPS = 1e-5                    # torch.nn.LayerNorm default
NEG_BIAS = -1e9                  # finite "minus infinity" for key padding
VMEM_LIMIT = 32 * 1024 * 1024    # safe on v5e / v6e / v7x


def _ln(x, g, b):
    """LayerNorm over the last dim (f32 math)."""
    mu = jnp.mean(x, axis=-1, keepdims=True)
    var = jnp.mean(jnp.square(x - mu), axis=-1, keepdims=True)
    return (x - mu) * lax.rsqrt(var + LN_EPS) * g + b


def _pick_tile(n, target):
    """Largest divisor of n that is <= target (keeps blocks exact, no padding)."""
    t = max(1, min(target, n))
    while n % t:
        t -= 1
    return t


def _resident(arr):
    """BlockSpec for a small 2-D array that stays VMEM-resident across a 1-D grid."""
    return pl.BlockSpec(arr.shape, lambda i: (0, 0))


# ----------------------------------------------------------------------------
# Kernel 1: fused Q/K (+V) projection over token-row tiles
# ----------------------------------------------------------------------------
def qkv_proj_kernel(x_ref, pos_ref, wqk_ref, bqk_ref, wv_ref, bv_ref,
                    q_ref, k_ref, v_ref, *, has_pos):
    x = x_ref[...].astype(jnp.float32)                   # (TM, D)
    if has_pos:
        xp = x + pos_ref[...].astype(jnp.float32)        # q = k input = source + pos
    else:
        xp = x
    xp_bf = xp.astype(jnp.bfloat16)
    x_bf = x.astype(jnp.bfloat16)                        # value input = source

    # fused Q/K projection: one (TM, D) @ (D, 2D) matmul, bf16 in / f32 acc
    qk = jnp.dot(xp_bf, wqk_ref[...],
                 preferred_element_type=jnp.float32) + bqk_ref[...]
    v = jnp.dot(x_bf, wv_ref[...],
                preferred_element_type=jnp.float32) + bv_ref[...]

    d = q_ref.shape[-1]
    q_ref[...] = qk[:, :d].astype(q_ref.dtype)           # 1/sqrt(hd) already in Wq
    k_ref[...] = qk[:, d:].astype(k_ref.dtype)
    v_ref[...] = v.astype(v_ref.dtype)


def qkv_projection(tokens, pos2d, prep, *, has_pos, row_block=256):
    n, d = tokens.shape
    tm = _pick_tile(n, row_block)
    grid = (n // tm,)
    row = pl.BlockSpec((tm, d), lambda i: (i, 0))
    pos_arg = pos2d if has_pos else jnp.zeros((1, d), jnp.float32)
    pos_spec = row if has_pos else _resident(pos_arg)
    args = (tokens, pos_arg, prep['wqk_t'], prep['bqk'], prep['wv_t'], prep['bv'])
    in_specs = [row, pos_spec] + [_resident(a) for a in args[2:]]
    out_sd = jax.ShapeDtypeStruct((n, d), jnp.bfloat16)
    return pl.pallas_call(
        functools.partial(qkv_proj_kernel, has_pos=has_pos),
        out_shape=(out_sd, out_sd, out_sd),
        grid_spec=pltpu.PrefetchScalarGridSpec(
            num_scalar_prefetch=0, grid=grid,
            in_specs=in_specs, out_specs=[row, row, row]),
        compiler_params=pltpu.CompilerParams(
            dimension_semantics=("parallel",),
            vmem_limit_bytes=VMEM_LIMIT),
    )(*args)


# ----------------------------------------------------------------------------
# Kernel 2: flash-style multi-head attention, heads batched in one dot_general
# ----------------------------------------------------------------------------
def flash_attn_kernel(maskb_ref, q_ref, k_ref, v_ref, o_ref,
                      m_sc, l_sc, acc_sc):
    ki = pl.program_id(2)

    @pl.when(ki == 0)
    def _():
        m_sc[...] = jnp.full(m_sc.shape, -jnp.inf, m_sc.dtype)
        l_sc[...] = jnp.zeros(l_sc.shape, l_sc.dtype)
        acc_sc[...] = jnp.zeros(acc_sc.shape, acc_sc.dtype)

    # scores for ALL heads of this batch in one batched matmul: (H, TQ, TK)
    s = jnp.einsum('hqe,hke->hqk', q_ref[...], k_ref[...],
                   preferred_element_type=jnp.float32)
    s = s + maskb_ref[...]                                # (1, 1, TK) key-padding bias

    m_prev = m_sc[...]
    m_new = jnp.maximum(m_prev, jnp.max(s, axis=-1, keepdims=True))
    alpha = jnp.exp(m_prev - m_new)
    p = jnp.exp(s - m_new)
    l_sc[...] = alpha * l_sc[...] + jnp.sum(p, axis=-1, keepdims=True)
    acc_sc[...] = alpha * acc_sc[...] + jnp.einsum(
        'hqk,hke->hqe', p.astype(v_ref.dtype), v_ref[...],
        preferred_element_type=jnp.float32)
    m_sc[...] = m_new

    @pl.when(ki == pl.num_programs(2) - 1)
    def _():
        o_ref[...] = (acc_sc[...] *
                      pl.reciprocal(l_sc[...], approx=True)).astype(o_ref.dtype)


def flash_attention(q, k, v, maskb, batch, nhead, *, q_block=256, k_block=256):
    # q, k, v: (B*nhead, S, hd) bf16;  maskb: (B, 1, S) f32 additive bias
    bh, s, hd = q.shape
    tq = _pick_tile(s, q_block)
    tk = _pick_tile(s, k_block)
    grid = (batch, s // tq, s // tk)
    q_spec = pl.BlockSpec((nhead, tq, hd), lambda b, qi, ki: (b, qi, 0))
    kv_spec = pl.BlockSpec((nhead, tk, hd), lambda b, qi, ki: (b, ki, 0))
    m_spec = pl.BlockSpec((1, 1, tk), lambda b, qi, ki: (b, 0, ki))
    o_spec = pl.BlockSpec((nhead, tq, hd), lambda b, qi, ki: (b, qi, 0))
    return pl.pallas_call(
        flash_attn_kernel,
        out_shape=jax.ShapeDtypeStruct((bh, s, hd), jnp.bfloat16),
        grid_spec=pltpu.PrefetchScalarGridSpec(
            num_scalar_prefetch=0, grid=grid,
            in_specs=[m_spec, q_spec, kv_spec, kv_spec],
            out_specs=o_spec,
            scratch_shapes=[pltpu.VMEM((nhead, tq, 1), jnp.float32),
                            pltpu.VMEM((nhead, tq, 1), jnp.float32),
                            pltpu.VMEM((nhead, tq, hd), jnp.float32)]),
        compiler_params=pltpu.CompilerParams(
            dimension_semantics=("parallel", "parallel", "arbitrary"),
            vmem_limit_bytes=VMEM_LIMIT),
    )(maskb, q, k, v)


# ----------------------------------------------------------------------------
# Kernel 3: out-proj + residual + LN2 + FFN(act) + residual + LN3 (row tiles)
# ----------------------------------------------------------------------------
def post_attn_kernel(x_ref, pos_ref, attn_ref,
                     wo_ref, bo_ref, ln2g_ref, ln2b_ref,
                     w1_ref, b1_ref, w2_ref, b2_ref,
                     ln3g_ref, ln3b_ref, o_ref, *, activation, has_pos):
    x = x_ref[...].astype(jnp.float32)
    if has_pos:
        resid = x + pos_ref[...].astype(jnp.float32)      # residual base: source + pos
    else:
        resid = x

    attn = jnp.dot(attn_ref[...], wo_ref[...],
                   preferred_element_type=jnp.float32) + bo_ref[...]
    h1 = _ln(resid + attn, ln2g_ref[...], ln2b_ref[...])

    f = jnp.dot(h1.astype(jnp.bfloat16), w1_ref[...],
                preferred_element_type=jnp.float32) + b1_ref[...]
    if activation == 'relu':
        f = jnp.maximum(f, 0.0)
    elif activation == 'gelu':                            # exact erf form (torch default)
        f = 0.5 * f * (1.0 + lax.erf(f * (1.0 / math.sqrt(2.0))))
    else:
        raise RuntimeError(f'activation should be relu/gelu, not {activation}.')
    f = jnp.dot(f.astype(jnp.bfloat16), w2_ref[...],
                preferred_element_type=jnp.float32) + b2_ref[...]

    o_ref[...] = _ln(h1 + f, ln3g_ref[...], ln3b_ref[...]).astype(o_ref.dtype)


def post_attention(tokens, pos2d, attn2d, prep, *, activation, has_pos,
                   row_block=256):
    n, d = tokens.shape
    tm = _pick_tile(n, row_block)
    grid = (n // tm,)
    row = pl.BlockSpec((tm, d), lambda i: (i, 0))
    pos_arg = pos2d if has_pos else jnp.zeros((1, d), jnp.float32)
    pos_spec = row if has_pos else _resident(pos_arg)
    args = (tokens, pos_arg, attn2d,
            prep['wo_t'], prep['bo'], prep['ln2_g'], prep['ln2_b'],
            prep['w1_t'], prep['b1'], prep['w2_t'], prep['b2'],
            prep['ln3_g'], prep['ln3_b'])
    in_specs = [row, pos_spec, row] + [_resident(a) for a in args[3:]]
    return pl.pallas_call(
        functools.partial(post_attn_kernel, activation=activation,
                          has_pos=has_pos),
        out_shape=jax.ShapeDtypeStruct((n, d), tokens.dtype),
        grid_spec=pltpu.PrefetchScalarGridSpec(
            num_scalar_prefetch=0, grid=grid,
            in_specs=in_specs, out_specs=row),
        compiler_params=pltpu.CompilerParams(
            dimension_semantics=("parallel",),
            vmem_limit_bytes=VMEM_LIMIT),
    )(*args)


# ----------------------------------------------------------------------------
# One-time weight preprocessing (split / fuse / scale-fold / transpose / bf16)
# ----------------------------------------------------------------------------
def prepare_params(p, nhead):
    d = p['out_w'].shape[0]
    hd = d // nhead
    scale = 1.0 / math.sqrt(hd)

    wq = p['in_proj_w'][0:d] * scale             # fold softmax scale into Wq, bq
    wk = p['in_proj_w'][d:2 * d]
    wv = p['in_proj_w'][2 * d:3 * d]
    bq = p['in_proj_b'][0:d] * scale
    bk = p['in_proj_b'][d:2 * d]
    bv = p['in_proj_b'][2 * d:3 * d]

    return dict(
        nhead=nhead,
        wqk_t=jnp.concatenate([wq, wk], axis=0).T.astype(jnp.bfloat16),  # (D, 2D)
        bqk=jnp.concatenate([bq, bk]).reshape(1, 2 * d).astype(jnp.float32),
        wv_t=wv.T.astype(jnp.bfloat16),                                   # (D, D)
        bv=bv.reshape(1, d).astype(jnp.float32),
        wo_t=p['out_w'].T.astype(jnp.bfloat16),                           # (D, D)
        bo=p['out_b'].reshape(1, d).astype(jnp.float32),
        ln2_g=p['ln2_g'].reshape(1, d).astype(jnp.float32),
        ln2_b=p['ln2_b'].reshape(1, d).astype(jnp.float32),
        w1_t=p['w1'].T.astype(jnp.bfloat16),                              # (D, dff)
        b1=p['b1'].reshape(1, -1).astype(jnp.float32),
        w2_t=p['w2'].T.astype(jnp.bfloat16),                              # (dff, D)
        b2=p['b2'].reshape(1, d).astype(jnp.float32),
        ln3_g=p['ln3_g'].reshape(1, d).astype(jnp.float32),
        ln3_b=p['ln3_b'].reshape(1, d).astype(jnp.float32),
    )


# ----------------------------------------------------------------------------
# AttentionLayer.forward
# ----------------------------------------------------------------------------
def attention_layer_forward(prep, source, pos=None, mask=None, *,
                            activation='relu', row_block=256,
                            q_block=256, k_block=256):
    s, b, d = source.shape
    nhead = prep['nhead']
    hd = d // nhead
    has_pos = pos is not None

    tokens = source.reshape(s * b, d)
    pos2d = pos.reshape(s * b, d) if has_pos else None
    if mask is None:
        maskb = jnp.zeros((b, 1, s), jnp.float32)
    else:
        maskb = jnp.where(mask, NEG_BIAS, 0.0).astype(jnp.float32).reshape(b, 1, s)

    q2, k2, v2 = qkv_projection(tokens, pos2d, prep, has_pos=has_pos,
                                row_block=row_block)

    # layout plumbing (wrapper-side, one pass): (S*B, D) -> (B*nhead, S, hd)
    def split_heads(t):
        return (t.reshape(s, b, nhead, hd)
                 .transpose(1, 2, 0, 3)
                 .reshape(b * nhead, s, hd))

    attn = flash_attention(split_heads(q2), split_heads(k2), split_heads(v2),
                           maskb, b, nhead, q_block=q_block, k_block=k_block)
    attn2d = (attn.reshape(b, nhead, s, hd)
                  .transpose(2, 0, 1, 3)
                  .reshape(s * b, d))

    out2d = post_attention(tokens, pos2d, attn2d, prep, activation=activation,
                           has_pos=has_pos, row_block=row_block)
    return out2d.reshape(s, b, d)


# ----------------------------------------------------------------------------
# Pure-JAX f32 reference for a numerical self-check
# ----------------------------------------------------------------------------
def reference_forward(p, source, pos, mask, nhead, activation='relu'):
    s, b, d = source.shape
    hd = d // nhead
    qk_in = source if pos is None else source + pos

    def lin(inp, w, bias):
        return jnp.einsum('sbd,ed->sbe', inp, w) + bias

    q = lin(qk_in, p['in_proj_w'][0:d], p['in_proj_b'][0:d])
    k = lin(qk_in, p['in_proj_w'][d:2 * d], p['in_proj_b'][d:2 * d])
    v = lin(source, p['in_proj_w'][2 * d:], p['in_proj_b'][2 * d:])

    def heads(t):  # (S,B,D) -> (B, H, S, hd)
        return t.reshape(s, b, nhead, hd).transpose(1, 2, 0, 3)

    qh, kh, vh = heads(q), heads(k), heads(v)
    sc = jnp.einsum('bhqe,bhke->bhqk', qh, kh) / math.sqrt(hd)
    if mask is not None:
        sc = sc + jnp.where(mask, NEG_BIAS, 0.0)[:, None, None, :]
    pa = jax.nn.softmax(sc, axis=-1)
    attn = jnp.einsum('bhqk,bhke->bhqe', pa, vh).transpose(2, 0, 1, 3).reshape(s, b, d)
    attn = lin(attn, p['out_w'], p['out_b'])

    h1 = _ln(qk_in + attn, p['ln2_g'], p['ln2_b'])
    f = jnp.einsum('sbd,fd->sbf', h1, p['w1']) + p['b1']
    f = jnp.maximum(f, 0.0) if activation == 'relu' else jax.nn.gelu(f, approximate=False)
    f = jnp.einsum('sbf,df->sbd', f, p['w2']) + p['b2']
    return _ln(h1 + f, p['ln3_g'], p['ln3_b'])


# ----------------------------------------------------------------------------
# Deterministic parameter init (torch layout)
# ----------------------------------------------------------------------------
def init_params(key, d_model, dff):
    keys = iter(jax.random.split(key, 16))

    def xavier(shape):
        fan_out, fan_in = shape
        bound = math.sqrt(6.0 / (fan_in + fan_out))
        return jax.random.uniform(next(keys), shape, jnp.float32, -bound, bound)

    def small(shape):
        return 0.02 * jax.random.normal(next(keys), shape, jnp.float32)

    return dict(
        in_proj_w=xavier((3 * d_model, d_model)),   # MHA in_proj_weight
        in_proj_b=small((3 * d_model,)),
        out_w=xavier((d_model, d_model)),           # MHA out_proj
        out_b=small((d_model,)),
        ln2_g=1.0 + small((d_model,)),
        ln2_b=small((d_model,)),
        w1=xavier((dff, d_model)),                  # linear1
        b1=small((dff,)),
        w2=xavier((d_model, dff)),                  # linear2
        b2=small((d_model,)),
        ln3_g=1.0 + small((d_model,)),
        ln3_b=small((d_model,)),
    )


if __name__ == "__main__":
    d_model, nhead, dff = 128, 8, 256
    B, S = 2, 16

    key = jax.random.PRNGKey(0)
    k_par, k_src, k_pos = jax.random.split(key, 3)
    params = init_params(k_par, d_model, dff)
    prep = prepare_params(params, nhead)            # one-time cast/transpose/fuse

    source = jax.random.normal(k_src, (S, B, d_model), jnp.float32)   # (S, B, D)
    pos = jax.random.normal(k_pos, (S, B, d_model), jnp.float32)      # (S, B, D)
    # key-padding mask: last 3 positions of batch 1 are padded
    mask = jnp.zeros((B, S), bool).at[1, S - 3:].set(True)

    # small tiles to exercise multi-step grids at these tiny demo shapes
    out = attention_layer_forward(prep, source, pos, mask, activation='relu',
                                  row_block=16, q_block=8, k_block=8)
    out = jax.block_until_ready(out)
    assert out.shape == (S, B, d_model), out.shape

    ref = reference_forward(params, source, pos, mask, nhead, activation='relu')
    err = float(jnp.max(jnp.abs(out - ref)))
    assert err < 0.15, f"mismatch vs reference: {err}"   # bf16 matmuls vs f32 ref

    # also exercise the pos=None / mask=None fast path
    out2 = attention_layer_forward(prep, source, None, None, activation='relu',
                                   row_block=16, q_block=16, k_block=16)
    out2 = jax.block_until_ready(out2)
    ref2 = reference_forward(params, source, None, None, nhead, activation='relu')
    err2 = float(jnp.max(jnp.abs(out2 - ref2)))
    assert err2 < 0.15, f"mismatch vs reference (no pos/mask): {err2}"

    print("KERNEL_OK")
</pallas_src>

<mosaic_0001>
module attributes {stable_mosaic.version = 11 : i64} {
  func.func @qkv_proj_kernel(%arg0: i32, %arg1: memref<16x128xf32, #tpu.memory_space<vmem>>, %arg2: memref<16x128xf32, #tpu.memory_space<vmem>>, %arg3: memref<128x256xbf16, #tpu.memory_space<vmem>>, %arg4: memref<1x256xf32, #tpu.memory_space<vmem>>, %arg5: memref<128x128xbf16, #tpu.memory_space<vmem>>, %arg6: memref<1x128xf32, #tpu.memory_space<vmem>>, %arg7: memref<16x128xbf16, #tpu.memory_space<vmem>>, %arg8: memref<16x128xbf16, #tpu.memory_space<vmem>>, %arg9: memref<16x128xbf16, #tpu.memory_space<vmem>>) attributes {dimension_semantics = [#tpu.dimension_semantics<parallel>], iteration_bounds = array<i64: 2>, scalar_prefetch = 0 : i64, scratch_operands = 0 : i64, tpu.core_type = #tpu.core_type<tc>, window_params = [{transform_indices = @transform_0, window_bounds = array<i64: 16, 128>}, {transform_indices = @transform_1, window_bounds = array<i64: 16, 128>}, {pipeline_mode = #tpu.pipeline_mode<synchronous>, transform_indices = @transform_2, window_bounds = array<i64: 128, 256>}, {pipeline_mode = #tpu.pipeline_mode<synchronous>, transform_indices = @transform_3, window_bounds = array<i64: 1, 256>}, {pipeline_mode = #tpu.pipeline_mode<synchronous>, transform_indices = @transform_4, window_bounds = array<i64: 128, 128>}, {pipeline_mode = #tpu.pipeline_mode<synchronous>, transform_indices = @transform_5, window_bounds = array<i64: 1, 128>}, {transform_indices = @transform_6, window_bounds = array<i64: 16, 128>}, {transform_indices = @transform_7, window_bounds = array<i64: 16, 128>}, {transform_indices = @transform_8, window_bounds = array<i64: 16, 128>}]} {
    %c0 = arith.constant 0 : index
    %c0_0 = arith.constant 0 : index
    %0 = vector.load %arg1[%c0, %c0_0] : memref<16x128xf32, #tpu.memory_space<vmem>>, vector<16x128xf32>
    %c0_1 = arith.constant 0 : index
    %c0_2 = arith.constant 0 : index
    %1 = vector.load %arg2[%c0_1, %c0_2] : memref<16x128xf32, #tpu.memory_space<vmem>>, vector<16x128xf32>
    %2 = arith.addf %0, %1 : vector<16x128xf32>
    %3 = arith.truncf %2 : vector<16x128xf32> to vector<16x128xbf16>
    %4 = arith.truncf %0 : vector<16x128xf32> to vector<16x128xbf16>
    %c0_3 = arith.constant 0 : index
    %c0_4 = arith.constant 0 : index
    %5 = vector.load %arg3[%c0_3, %c0_4] : memref<128x256xbf16, #tpu.memory_space<vmem>>, vector<128x256xbf16>
    %cst = arith.constant dense<0.000000e+00> : vector<16x256xf32>
    %6 = tpu.matmul %3, %5, %cst {dimension_numbers = #tpu.dot_dimension_numbers<[1], [0], [0], [1], [0, 0, 1, 1], [], []>} : vector<16x128xbf16>, vector<128x256xbf16>, vector<16x256xf32> -> vector<16x256xf32>
    %c0_5 = arith.constant 0 : index
    %c0_6 = arith.constant 0 : index
    %7 = vector.load %arg4[%c0_5, %c0_6] : memref<1x256xf32, #tpu.memory_space<vmem>>, vector<1x256xf32>
    %8 = vector.broadcast %7 : vector<1x256xf32> to vector<16x256xf32>
    %9 = arith.addf %6, %8 : vector<16x256xf32>
    %c0_7 = arith.constant 0 : index
    %c0_8 = arith.constant 0 : index
    %10 = vector.load %arg5[%c0_7, %c0_8] : memref<128x128xbf16, #tpu.memory_space<vmem>>, vector<128x128xbf16>
    %cst_9 = arith.constant dense<0.000000e+00> : vector<16x128xf32>
    %11 = tpu.matmul %4, %10, %cst_9 {dimension_numbers = #tpu.dot_dimension_numbers<[1], [0], [0], [1], [0, 0, 1, 1], [], []>} : vector<16x128xbf16>, vector<128x128xbf16>, vector<16x128xf32> -> vector<16x128xf32>
    %c0_10 = arith.constant 0 : index
    %c0_11 = arith.constant 0 : index
    %12 = vector.load %arg6[%c0_10, %c0_11] : memref<1x128xf32, #tpu.memory_space<vmem>>, vector<1x128xf32>
    %13 = vector.broadcast %12 : vector<1x128xf32> to vector<16x128xf32>
    %14 = arith.addf %11, %13 : vector<16x128xf32>
    %15 = vector.extract_strided_slice %9 {offsets = [0, 0], sizes = [16, 128], strides = [1, 1]} : vector<16x256xf32> to vector<16x128xf32>
    %16 = arith.truncf %15 : vector<16x128xf32> to vector<16x128xbf16>
    %c0_12 = arith.constant 0 : index
    %c0_13 = arith.constant 0 : index
    %17 = vector.load %arg7[%c0_12, %c0_13] : memref<16x128xbf16, #tpu.memory_space<vmem>>, vector<16x128xbf16>
    tpu.vector_store %arg7[%c0_12, %c0_13], %16 {strides = array<i32>} : memref<16x128xbf16, #tpu.memory_space<vmem>>, vector<16x128xbf16>,
    %18 = vector.extract_strided_slice %9 {offsets = [0, 128], sizes = [16, 128], strides = [1, 1]} : vector<16x256xf32> to vector<16x128xf32>
    %19 = arith.truncf %18 : vector<16x128xf32> to vector<16x128xbf16>
    %c0_14 = arith.constant 0 : index
    %c0_15 = arith.constant 0 : index
    %20 = vector.load %arg8[%c0_14, %c0_15] : memref<16x128xbf16, #tpu.memory_space<vmem>>, vector<16x128xbf16>
    tpu.vector_store %arg8[%c0_14, %c0_15], %19 {strides = array<i32>} : memref<16x128xbf16, #tpu.memory_space<vmem>>, vector<16x128xbf16>,
    %21 = arith.truncf %14 : vector<16x128xf32> to vector<16x128xbf16>
    %c0_16 = arith.constant 0 : index
    %c0_17 = arith.constant 0 : index
    %22 = vector.load %arg9[%c0_16, %c0_17] : memref<16x128xbf16, #tpu.memory_space<vmem>>, vector<16x128xbf16>
    tpu.vector_store %arg9[%c0_16, %c0_17], %21 {strides = array<i32>} : memref<16x128xbf16, #tpu.memory_space<vmem>>, vector<16x128xbf16>,
    return
  }
  func.func @transform_0(%arg0: i32) -> (i32, i32) {
    %c0_i32 = arith.constant 0 : i32
    %c0_i32_0 = arith.constant 0 : i32
    return %arg0, %c0_i32 : i32, i32
  }
  func.func @transform_1(%arg0: i32) -> (i32, i32) {
    %c0_i32 = arith.constant 0 : i32
    %c0_i32_0 = arith.constant 0 : i32
    return %arg0, %c0_i32 : i32, i32
  }
  func.func @transform_2(%arg0: i32) -> (i32, i32) {
    %c0_i32 = arith.constant 0 : i32
    %c0_i32_0 = arith.constant 0 : i32
    %c0_i32_1 = arith.constant 0 : i32
    return %c0_i32, %c0_i32_0 : i32, i32
  }
  func.func @transform_3(%arg0: i32) -> (i32, i32) {
    %c0_i32 = arith.constant 0 : i32
    %c0_i32_0 = arith.constant 0 : i32
    %c0_i32_1 = arith.constant 0 : i32
    return %c0_i32, %c0_i32_0 : i32, i32
  }
  func.func @transform_4(%arg0: i32) -> (i32, i32) {
    %c0_i32 = arith.constant 0 : i32
    %c0_i32_0 = arith.constant 0 : i32
    %c0_i32_1 = arith.constant 0 : i32
    return %c0_i32, %c0_i32_0 : i32, i32
  }
  func.func @transform_5(%arg0: i32) -> (i32, i32) {
    %c0_i32 = arith.constant 0 : i32
    %c0_i32_0 = arith.constant 0 : i32
    %c0_i32_1 = arith.constant 0 : i32
    return %c0_i32, %c0_i32_0 : i32, i32
  }
  func.func @transform_6(%arg0: i32) -> (i32, i32) {
    %c0_i32 = arith.constant 0 : i32
    %c0_i32_0 = arith.constant 0 : i32
    return %arg0, %c0_i32 : i32, i32
  }
  func.func @transform_7(%arg0: i32) -> (i32, i32) {
    %c0_i32 = arith.constant 0 : i32
    %c0_i32_0 = arith.constant 0 : i32
    return %arg0, %c0_i32 : i32, i32
  }
  func.func @transform_8(%arg0: i32) -> (i32, i32) {
    %c0_i32 = arith.constant 0 : i32
    %c0_i32_0 = arith.constant 0 : i32
    return %arg0, %c0_i32 : i32, i32
  }
}

</mosaic_0001>

<llo_original>
// kernel: tpu_custom_call.1
$region0: #{tpu_custom_call.1}
  #allocation0 [shape = 'u32[]', space=smem, size = 0x4, offset = 0x4, fixed_abs, tag = 'smem constant byte address 0x4 - core index']
  #allocation1 [shape = 'u32[144,128]{1,0:T(1,128)}', space=vmem, size = 0x12000, scoped, tag = 'internal scratch']
  %s0 = inlined_call_operand.hbm [shape: f32[32,128], index: 0, kind: input, shape index: {}]
  %s1 = inlined_call_operand.hbm [shape: f32[32,128], index: 1, kind: input, shape index: {}]
  %s2 = inlined_call_operand.hbm [shape: bf16[128,256], index: 2, kind: input, shape index: {}]
  %s3 = inlined_call_operand.vmem [shape: f32[1,256], index: 3, kind: input, shape index: {}]
  %s4 = inlined_call_operand.hbm [shape: bf16[128,128], index: 4, kind: input, shape index: {}]
  %s5 = inlined_call_operand.vmem [shape: f32[1,128], index: 5, kind: input, shape index: {}]
  %s6 = inlined_call_operand.hbm [shape: bf16[32,128], index: 6, kind: output, shape index: {0}]
  %s7 = inlined_call_operand.hbm [shape: bf16[32,128], index: 7, kind: output, shape index: {1}]
  %s8 = inlined_call_operand.hbm [shape: bf16[32,128], index: 8, kind: output, shape index: {2}]
  %9 = xla_tuple %s6, %s7, %s8
  %s10 = sld [smem:[#allocation0]]
  $region89: #{tpu_custom_call.1} parent=0
    _
  %s12 = ssub.s32 1, %s10
  %s13 = scalar_select 0, %s12, %s10
  $region1: #{tpu_custom_call.1} parent=0
    #allocation2 [shape = 'u8[16384]{0}', space=vmem, size = 0x4000, scoped, tag = 'input window, operand 0']
    #allocation3 [shape = 's32[2]{0}', space=sflag, size = 0x8, scoped, tag = 'scoped memory for tpu_custom_call.1']
    #allocation4 [shape = 's32[2]{0}', space=sflag, size = 0x8, scoped, tag = 'scoped memory for tpu_custom_call.1']
    #allocation5 [shape = 'u8[16384]{0}', space=vmem, size = 0x4000, scoped, tag = 'input window, operand 1']
    #allocation6 [shape = 's32[2]{0}', space=sflag, size = 0x8, scoped, tag = 'scoped memory for tpu_custom_call.1']
    #allocation7 [shape = 'u8[65536]{0}', space=vmem, size = 0x10000, scoped, tag = 'input window, operand 2, single buffered']
    #allocation8 [shape = 'u8[32768]{0}', space=vmem, size = 0x8000, scoped, tag = 'input window, operand 4, single buffered']
    #allocation9 [shape = 's32[1]{0}', space=sflag, size = 0x4, scoped, tag = 'scoped memory for tpu_custom_call.1']
    #allocation10 [shape = 'u8[8192]{0}', space=vmem, size = 0x2000, scoped, tag = 'output window, operand 0']
    #allocation11 [shape = 'u8[8192]{0}', space=vmem, size = 0x2000, scoped, tag = 'output window, operand 1']
    #allocation12 [shape = 's32[2]{0}', space=sflag, size = 0x8, scoped, tag = 'scoped memory for tpu_custom_call.1']
    #allocation13 [shape = 'u8[8192]{0}', space=vmem, size = 0x2000, scoped, tag = 'output window, operand 2']
    %14 = vsyncpa [#allocation3], 0
    %s15 = scalar_lea.sflag [#allocation3], 1
    %16 = vsyncpa %s15, 0
    %17 = vsyncpa [#allocation6], 0
    %s18 = scalar_lea.sflag [#allocation6], 1
    %19 = vsyncpa %s18, 0
    %20 = vsyncpa [#allocation9], 0
    %21 = vsyncpa [#allocation4], 0
    %s22 = scalar_lea.sflag [#allocation4], 1
    %23 = vsyncpa %s22, 0
    %24 = vsyncpa [#allocation12], 0
    %s25 = scalar_lea.sflag [#allocation12], 1
    %26 = vsyncpa %s25, 0
    loop: start=0, step=1, limit=4
    $region2: #{tpu_custom_call.1} parent=1 // loop_pre_header
      _
    $region3: #{tpu_custom_call.1} parent=1 // loop_header
      %s28 = sphi 0, %s32
      %p29 = scmp.ge.s32.totalorder %s28, 4
      %s38 = sphi 0, %s40
      %s41 = sphi 0, %s38
      %s42 = sphi 0, %s41
      %s58 = sphi 0, %s42
      %s64 = sphi 0, %s66
      %s67 = sphi 0, %s64
      %s68 = sphi 0, %s67
      %s84 = sphi 0, %s68
      %s88 = sphi 0, %s88
      %s90 = sphi 0, %s88
      %s91 = sphi 0, %s90
      %s105 = sphi 0, %s91
      %s109 = sphi 0, %s109
      %s111 = sphi 0, %s109
      %s112 = sphi 0, %s111
      %s126 = sphi 0, %s112
      %s130 = sphi 0, %s130
      %s132 = sphi 0, %s130
      %s133 = sphi 0, %s132
      %s147 = sphi 0, %s133
      %s151 = sphi 0, %s151
      %s153 = sphi 0, %s151
      %s154 = sphi 0, %s153
      %s168 = sphi 0, %s154
      %s174 = sphi 0, %s176
      %s177 = sphi 0, %s174
      %s178 = sphi 0, %s177
      %s194 = sphi 0, %s178
      %s200 = sphi 0, %s202
      %s203 = sphi 0, %s200
      %s204 = sphi 0, %s203
      %s220 = sphi 0, %s204
      %s226 = sphi 0, %s228
      %s229 = sphi 0, %s226
      %s230 = sphi 0, %s229
      %s246 = sphi 0, %s230
    $region4: #{tpu_custom_call.1} parent=1 // loop_header_branch
      %31 = sbr.rel (%p29) target = $region8
    $region5: #{tpu_custom_call.1} parent=1 // loop_body
      %s33 = ssub.s32 %s28, 1
      %s34 = ssub.s32 %s28, 2
      %s35 = sadd.s32 %s28, 1
      %s36 = ssub.s32 %s28, %s35
      %p37 = scmp.eq.s32.totalorder %s36, 0
      %s39 = sadd.s32 %s38, 1
      %s40 = scalar_select %p37, %s38, %s39
      %p43 = pneg %p37
      %p44 = scmp.eq.s32.totalorder %s28, 1
      %p45 = por %p43, %p44
      %p46 = scmp.ne.s32.totalorder %s38, %s41
      %p47 = scmp.eq.s32.totalorder %s28, 0
      %p48 = por %p46, %p47
      %p49 = scmp.ne.s32.totalorder %s38, %s41
      %p50 = scmp.eq.s32.totalorder %s33, 1
      %p51 = por %p49, %p50
      %p52 = scmp.ne.s32.totalorder %s41, %s42
      %p53 = scmp.eq.s32.totalorder %s33, 0
      %p54 = por %p52, %p53
      %p55 = scmp.ne.s32.totalorder %s41, %s42
      %p56 = scmp.eq.s32.totalorder %s34, 1
      %p57 = por %p55, %p56
      %p59 = scmp.ne.s32.totalorder %s42, %s58
      %p60 = scmp.eq.s32.totalorder %s34, 0
      %p61 = por %p59, %p60
      %s62 = ssub.s32 %s28, %s35
      %p63 = scmp.eq.s32.totalorder %s62, 0
      %s65 = sadd.s32 %s64, 1
      %s66 = scalar_select %p63, %s64, %s65
      %p69 = pneg %p63
      %p70 = scmp.eq.s32.totalorder %s28, 1
      %p71 = por %p69, %p70
      %p72 = scmp.ne.s32.totalorder %s64, %s67
      %p73 = scmp.eq.s32.totalorder %s28, 0
      %p74 = por %p72, %p73
      %p75 = scmp.ne.s32.totalorder %s64, %s67
      %p76 = scmp.eq.s32.totalorder %s33, 1
      %p77 = por %p75, %p76
      %p78 = scmp.ne.s32.totalorder %s67, %s68
      %p79 = scmp.eq.s32.totalorder %s33, 0
      %p80 = por %p78, %p79
      %p81 = scmp.ne.s32.totalorder %s67, %s68
      %p82 = scmp.eq.s32.totalorder %s34, 1
      %p83 = por %p81, %p82
      %p85 = scmp.ne.s32.totalorder %s68, %s84
      %p86 = scmp.eq.s32.totalorder %s34, 0
      %p87 = por %p85, %p86
      %s89 = sadd.s32 %s88, 1
      %p92 = scmp.eq.s32.totalorder %s28, 1
      %p93 = scmp.ne.s32.totalorder %s88, %s90
      %p94 = scmp.eq.s32.totalorder %s28, 0
      %p95 = por %p93, %p94
      %p96 = scmp.ne.s32.totalorder %s88, %s90
      %p97 = scmp.eq.s32.totalorder %s33, 1
      %p98 = por %p96, %p97
      %p99 = scmp.ne.s32.totalorder %s90, %s91
      %p100 = scmp.eq.s32.totalorder %s33, 0
      %p101 = por %p99, %p100
      %p102 = scmp.ne.s32.totalorder %s90, %s91
      %p103 = scmp.eq.s32.totalorder %s34, 1
      %p104 = por %p102, %p103
      %p106 = scmp.ne.s32.totalorder %s91, %s105
      %p107 = scmp.eq.s32.totalorder %s34, 0
      %p108 = por %p106, %p107
      %s110 = sadd.s32 %s109, 1
      %p113 = scmp.eq.s32.totalorder %s28, 1
      %p114 = scmp.ne.s32.totalorder %s109, %s111
      %p115 = scmp.eq.s32.totalorder %s28, 0
      %p116 = por %p114, %p115
      %p117 = scmp.ne.s32.totalorder %s109, %s111
      %p118 = scmp.eq.s32.totalorder %s33, 1
      %p119 = por %p117, %p118
      %p120 = scmp.ne.s32.totalorder %s111, %s112
      %p121 = scmp.eq.s32.totalorder %s33, 0
      %p122 = por %p120, %p121
      %p123 = scmp.ne.s32.totalorder %s111, %s112
      %p124 = scmp.eq.s32.totalorder %s34, 1
      %p125 = por %p123, %p124
      %p127 = scmp.ne.s32.totalorder %s112, %s126
      %p128 = scmp.eq.s32.totalorder %s34, 0
      %p129 = por %p127, %p128
      %s131 = sadd.s32 %s130, 1
      %p134 = scmp.eq.s32.totalorder %s28, 1
      %p135 = scmp.ne.s32.totalorder %s130, %s132
      %p136 = scmp.eq.s32.totalorder %s28, 0
      %p137 = por %p135, %p136
      %p138 = scmp.ne.s32.totalorder %s130, %s132
      %p139 = scmp.eq.s32.totalorder %s33, 1
      %p140 = por %p138, %p139
      %p141 = scmp.ne.s32.totalorder %s132, %s133
      %p142 = scmp.eq.s32.totalorder %s33, 0
      %p143 = por %p141, %p142
      %p144 = scmp.ne.s32.totalorder %s132, %s133
      %p145 = scmp.eq.s32.totalorder %s34, 1
      %p146 = por %p144, %p145
      %p148 = scmp.ne.s32.totalorder %s133, %s147
      %p149 = scmp.eq.s32.totalorder %s34, 0
      %p150 = por %p148, %p149
      %s152 = sadd.s32 %s151, 1
      %p155 = scmp.eq.s32.totalorder %s28, 1
      %p156 = scmp.ne.s32.totalorder %s151, %s153
      %p157 = scmp.eq.s32.totalorder %s28, 0
      %p158 = por %p156, %p157
      %p159 = scmp.ne.s32.totalorder %s151, %s153
      %p160 = scmp.eq.s32.totalorder %s33, 1
      %p161 = por %p159, %p160
      %p162 = scmp.ne.s32.totalorder %s153, %s154
      %p163 = scmp.eq.s32.totalorder %s33, 0
      %p164 = por %p162, %p163
      %p165 = scmp.ne.s32.totalorder %s153, %s154
      %p166 = scmp.eq.s32.totalorder %s34, 1
      %p167 = por %p165, %p166
      %p169 = scmp.ne.s32.totalorder %s154, %s168
      %p170 = scmp.eq.s32.totalorder %s34, 0
      %p171 = por %p169, %p170
      %s172 = ssub.s32 %s28, %s35
      %p173 = scmp.eq.s32.totalorder %s172, 0
      %s175 = sadd.s32 %s174, 1
      %s176 = scalar_select %p173, %s174, %s175
      %p179 = pneg %p173
      %p180 = scmp.eq.s32.totalorder %s28, 1
      %p181 = por %p179, %p180
      %p182 = scmp.ne.s32.totalorder %s174, %s177
      %p183 = scmp.eq.s32.totalorder %s28, 0
      %p184 = por %p182, %p183
      %p185 = scmp.ne.s32.totalorder %s174, %s177
      %p186 = scmp.eq.s32.totalorder %s33, 1
      %p187 = por %p185, %p186
      %p188 = scmp.ne.s32.totalorder %s177, %s178
      %p189 = scmp.eq.s32.totalorder %s33, 0
      %p190 = por %p188, %p189
      %p191 = scmp.ne.s32.totalorder %s177, %s178
      %p192 = scmp.eq.s32.totalorder %s34, 1
      %p193 = por %p191, %p192
      %p195 = scmp.ne.s32.totalorder %s178, %s194
      %p196 = scmp.eq.s32.totalorder %s34, 0
      %p197 = por %p195, %p196
      %s198 = ssub.s32 %s28, %s35
      %p199 = scmp.eq.s32.totalorder %s198, 0
      %s201 = sadd.s32 %s200, 1
      %s202 = scalar_select %p199, %s200, %s201
      %p205 = pneg %p199
      %p206 = scmp.eq.s32.totalorder %s28, 1
      %p207 = por %p205, %p206
      %p208 = scmp.ne.s32.totalorder %s200, %s203
      %p209 = scmp.eq.s32.totalorder %s28, 0
      %p210 = por %p208, %p209
      %p211 = scmp.ne.s32.totalorder %s200, %s203
      %p212 = scmp.eq.s32.totalorder %s33, 1
      %p213 = por %p211, %p212
      %p214 = scmp.ne.s32.totalorder %s203, %s204
      %p215 = scmp.eq.s32.totalorder %s33, 0
      %p216 = por %p214, %p215
      %p217 = scmp.ne.s32.totalorder %s203, %s204
      %p218 = scmp.eq.s32.totalorder %s34, 1
      %p219 = por %p217, %p218
      %p221 = scmp.ne.s32.totalorder %s204, %s220
      %p222 = scmp.eq.s32.totalorder %s34, 0
      %p223 = por %p221, %p222
      %s224 = ssub.s32 %s28, %s35
      %p225 = scmp.eq.s32.totalorder %s224, 0
      %s227 = sadd.s32 %s226, 1
      %s228 = scalar_select %p225, %s226, %s227
      %p231 = pneg %p225
      %p232 = scmp.eq.s32.totalorder %s28, 1
      %p233 = por %p231, %p232
      %p234 = scmp.ne.s32.totalorder %s226, %s229
      %p235 = scmp.eq.s32.totalorder %s28, 0
      %p236 = por %p234, %p235
      %p237 = scmp.ne.s32.totalorder %s226, %s229
      %p238 = scmp.eq.s32.totalorder %s33, 1
      %p239 = por %p237, %p238
      %p240 = scmp.ne.s32.totalorder %s229, %s230
      %p241 = scmp.eq.s32.totalorder %s33, 0
      %p242 = por %p240, %p241
      %p243 = scmp.ne.s32.totalorder %s229, %s230
      %p244 = scmp.eq.s32.totalorder %s34, 1
      %p245 = por %p243, %p244
      %p247 = scmp.ne.s32.totalorder %s230, %s246
      %p248 = scmp.eq.s32.totalorder %s34, 0
      %p249 = por %p247, %p248
      %p250 = scmp.le.s32.totalorder 1, %s28
      %p251 = scmp.lt.s32.totalorder %s28, 3
      %p252 = pnand %p250, %p251
      %p253 = pneg %p252
      // Predicated region
      $region9: #{tpu_custom_call.1} parent=5 // pred_check
        _
      $region10: #{tpu_custom_call.1} parent=5 // pred_check_branch
        %255 = sbr.rel (%p252) target = $region12
      $region11: #{tpu_custom_call.1} parent=5 // pred_region
        %s256 = ssub.s32 %s28, 1
        // Predicated region
        $region13: #{tpu_custom_call.1} parent=11 // pred_check
          %p257 = pneg %p101
        $region14: #{tpu_custom_call.1} parent=11 // pred_check_branch
          %259 = sbr.rel (%p257) target = $region16
        $region15: #{tpu_custom_call.1} parent=11 // pred_region
          %s261 = ssub.s32 2048, 2048
          %262 = vsyncadd [#allocation6], %s261
          %s263 = sshll.u32 [#allocation7], 4
          %s264 = int_to_ptr.vmem [resolvable:$true] %s263
          %269 = dma.hbm_to_vmem [thread:$0]  %s2, 2048, %s264, [#allocation6], 128, 128, 8
        $region16: #{tpu_custom_call.1} parent=11 // pred_fallthru
          _
        // Predicated region
        $region17: #{tpu_custom_call.1} parent=11 // pred_check
          %p270 = pneg %p122
        $region18: #{tpu_custom_call.1} parent=11 // pred_check_branch
          %272 = sbr.rel (%p270) target = $region20
        $region19: #{tpu_custom_call.1} parent=11 // pred_region
          _
        $region20: #{tpu_custom_call.1} parent=11 // pred_fallthru
          _
        // Predicated region
        $region21: #{tpu_custom_call.1} parent=11 // pred_check
          %p273 = pneg %p143
        $region22: #{tpu_custom_call.1} parent=11 // pred_check_branch
          %275 = sbr.rel (%p273) target = $region24
        $region23: #{tpu_custom_call.1} parent=11 // pred_region
          %s277 = ssub.s32 1024, 1024
          %278 = vsyncadd [#allocation9], %s277
          %s279 = sshll.u32 [#allocation8], 4
          %s280 = int_to_ptr.vmem [resolvable:$true] %s279
          %285 = dma.hbm_to_vmem [thread:$0]  %s4, 1024, %s280, [#allocation9], 64, 64, 4
        $region24: #{tpu_custom_call.1} parent=11 // pred_fallthru
          _
        // Predicated region
        $region25: #{tpu_custom_call.1} parent=11 // pred_check
          %p286 = pneg %p164
        $region26: #{tpu_custom_call.1} parent=11 // pred_check_branch
          %288 = sbr.rel (%p286) target = $region28
        $region27: #{tpu_custom_call.1} parent=11 // pred_region
          _
        $region28: #{tpu_custom_call.1} parent=11 // pred_fallthru
          _
      $region12: #{tpu_custom_call.1} parent=5 // pred_fallthru
        _
      %p289 = scmp.lt.s32.totalorder %s28, 2
      // Predicated region
      $region29: #{tpu_custom_call.1} parent=5 // pred_check
        %p290 = pneg %p289
      $region30: #{tpu_custom_call.1} parent=5 // pred_check_branch
        %292 = sbr.rel (%p290) target = $region32
      $region31: #{tpu_custom_call.1} parent=5 // pred_region
        // Predicated region
        $region33: #{tpu_custom_call.1} parent=31 // pred_check
          %p293 = pneg %p48
        $region34: #{tpu_custom_call.1} parent=31 // pred_check_branch
          %295 = sbr.rel (%p293) target = $region36
        $region35: #{tpu_custom_call.1} parent=31 // pred_region
          %s296 = sand.u32 %s38, 1
          %s297 = scalar_lea.sflag [#allocation3], %s296
          %s298 = sand.u32 %s38, 1
          %s299 = smul.addr %s298, 16
          %s300 = scalar_lea.vmem [#allocation2], %s299
          %s301 = smul.u32 2, %s28
          %s303 = ssub.s32 256, 256
          %304 = vsyncadd %s297, %s303
          %s305 = smul.addr %s301, 128
          %s306 = scalar_lea.hbm %s0, %s305
          %s307 = sshll.u32 %s300, 4
          %s308 = int_to_ptr.vmem [resolvable:$true] %s307
          %313 = dma.hbm_to_vmem [thread:$0]  %s306, 256, %s308, %s297, 128, 128, 8
        $region36: #{tpu_custom_call.1} parent=31 // pred_fallthru
          _
        // Predicated region
        $region37: #{tpu_custom_call.1} parent=31 // pred_check
          %p314 = pneg %p74
        $region38: #{tpu_custom_call.1} parent=31 // pred_check_branch
          %316 = sbr.rel (%p314) target = $region40
        $region39: #{tpu_custom_call.1} parent=31 // pred_region
          %s317 = sand.u32 %s28, 1
          %s318 = scalar_lea.sflag [#allocation6], %s317
          %s319 = sand.u32 %s64, 1
          %s320 = smul.addr %s319, 16
          %s321 = scalar_lea.vmem [#allocation5], %s320
          %s322 = smul.u32 2, %s28
          %s324 = ssub.s32 256, 256
          %325 = vsyncadd %s318, %s324
          %s326 = smul.addr %s322, 128
          %s327 = scalar_lea.hbm %s1, %s326
          %s328 = sshll.u32 %s321, 4
          %s329 = int_to_ptr.vmem [resolvable:$true] %s328
          %334 = dma.hbm_to_vmem [thread:$0]  %s327, 256, %s329, %s318, 128, 128, 8
        $region40: #{tpu_custom_call.1} parent=31 // pred_fallthru
          _
      $region32: #{tpu_custom_call.1} parent=5 // pred_fallthru
        _
      %p335 = scmp.le.s32.totalorder 1, %s28
      %p336 = scmp.lt.s32.totalorder %s28, 3
      %p337 = pnand %p335, %p336
      %p338 = pneg %p337
      // Predicated region
      $region41: #{tpu_custom_call.1} parent=5 // pred_check
        _
      $region42: #{tpu_custom_call.1} parent=5 // pred_check_branch
        %340 = sbr.rel (%p337) target = $region44
      $region43: #{tpu_custom_call.1} parent=5 // pred_region
        %s341 = ssub.s32 %s28, 1
        %s342 = sand.u32 %s41, 1
        %s343 = scalar_lea.sflag [#allocation3], %s342
        %s344 = sand.u32 %s41, 1
        %s345 = smul.addr %s344, 16
        %s346 = scalar_lea.vmem [#allocation2], %s345
        // Predicated region
        $region45: #{tpu_custom_call.1} parent=43 // pred_check
          %p347 = pneg %p54
        $region46: #{tpu_custom_call.1} parent=43 // pred_check_branch
          %349 = sbr.rel (%p347) target = $region48
        $region47: #{tpu_custom_call.1} parent=43 // pred_region
          %350 = dma.done %s343, 256
        $region48: #{tpu_custom_call.1} parent=43 // pred_fallthru
          _
        %s351 = sand.u32 %s33, 1
        %s352 = scalar_lea.sflag [#allocation6], %s351
        %s353 = sand.u32 %s67, 1
        %s354 = smul.addr %s353, 16
        %s355 = scalar_lea.vmem [#allocation5], %s354
        // Predicated region
        $region49: #{tpu_custom_call.1} parent=43 // pred_check
          %p356 = pneg %p80
        $region50: #{tpu_custom_call.1} parent=43 // pred_check_branch
          %358 = sbr.rel (%p356) target = $region52
        $region51: #{tpu_custom_call.1} parent=43 // pred_region
          %359 = dma.done %s352, 256
        $region52: #{tpu_custom_call.1} parent=43 // pred_fallthru
          _
        // Predicated region
        $region53: #{tpu_custom_call.1} parent=43 // pred_check
          %p360 = pneg %p101
        $region54: #{tpu_custom_call.1} parent=43 // pred_check_branch
          %362 = sbr.rel (%p360) target = $region56
        $region55: #{tpu_custom_call.1} parent=43 // pred_region
          %363 = dma.done [#allocation6], 2048
        $region56: #{tpu_custom_call.1} parent=43 // pred_fallthru
          _
        // Predicated region
        $region57: #{tpu_custom_call.1} parent=43 // pred_check
          %p364 = pneg %p143
        $region58: #{tpu_custom_call.1} parent=43 // pred_check_branch
          %366 = sbr.rel (%p364) target = $region60
        $region59: #{tpu_custom_call.1} parent=43 // pred_region
          %367 = dma.done [#allocation9], 1024
        $region60: #{tpu_custom_call.1} parent=43 // pred_fallthru
          _
        %s368 = sand.u32 %s41, 1
        %s369 = scalar_lea.sflag [#allocation3], %s368
        %s370 = sand.u32 %s41, 1
        %s371 = smul.addr %s370, 16
        %s372 = scalar_lea.vmem [#allocation2], %s371
        %p373 = pneg %p54
        %p374 = pneg %p51
        %s375 = sand.u32 %s33, 1
        %s376 = scalar_lea.sflag [#allocation6], %s375
        %s377 = sand.u32 %s67, 1
        %s378 = smul.addr %s377, 16
        %s379 = scalar_lea.vmem [#allocation5], %s378
        %p380 = pneg %p80
        %p381 = pneg %p77
        %p382 = pneg %p101
        %p383 = pneg %p98
        %p384 = pneg %p122
        %p385 = pneg %p119
        %p386 = pneg %p143
        %p387 = pneg %p140
        %p388 = pneg %p164
        %p389 = pneg %p161
        %p390 = pneg %p190
        %p391 = pneg %p187
        %s392 = sand.u32 %s177, 1
        %s393 = scalar_lea.sflag [#allocation4], %s392
        %s394 = sand.u32 %s177, 1
        %s395 = smul.addr %s394, 8
        %s396 = scalar_lea.vmem [#allocation10], %s395
        %p397 = pneg %p216
        %p398 = pneg %p213
        %s399 = sand.u32 %s33, 1
        %s400 = scalar_lea.sflag [#allocation12], %s399
        %s401 = sand.u32 %s203, 1
        %s402 = smul.addr %s401, 8
        %s403 = scalar_lea.vmem [#allocation11], %s402
        %p404 = pneg %p242
        %p405 = pneg %p239
        %s406 = sand.u32 %s33, 1
        %s407 = scalar_lea.sflag [#allocation12], %s406
        %s408 = sand.u32 %s229, 1
        %s409 = smul.addr %s408, 8
        %s410 = scalar_lea.vmem [#allocation13], %s409
        %s411 = smul.u32 2, %s33
        %s412 = smul.u32 2, %s33
        %s413 = smul.u32 2, %s33
        %s414 = smul.u32 2, %s33
        %s415 = smul.u32 2, %s33
        %v417 = vld [vmem:[%s346] sm:$0xff]
        %v418 = vld [vmem:[%s346 + $0x8] sm:$0xff]
        %v419 = vld [vmem:[%s355] sm:$0xff]
        %v420 = vld [vmem:[%s355 + $0x8] sm:$0xff]
        %v421 = vadd.f32 %v417, %v419
        %v422 = vadd.f32 %v418, %v420
        %v423 = vpack.c.bf16 %v422, %v421
        %v424 = vpack.c.bf16 %v418, %v417
        %v425 = vld [vmem:[#allocation7] sm:$0xff]
        %v426 = vld [vmem:[#allocation7 + $0x8] sm:$0xff]
        %v427 = vld [vmem:[#allocation7 + $0x10] sm:$0xff]
        %v428 = vld [vmem:[#allocation7 + $0x18] sm:$0xff]
        %v429 = vld [vmem:[#allocation7 + $0x20] sm:$0xff]
        %v430 = vld [vmem:[#allocation7 + $0x28] sm:$0xff]
        %v431 = vld [vmem:[#allocation7 + $0x30] sm:$0xff]
        %v432 = vld [vmem:[#allocation7 + $0x38] sm:$0xff]
        %v433 = vld [vmem:[#allocation7 + $0x40] sm:$0xff]
        %v434 = vld [vmem:[#allocation7 + $0x48] sm:$0xff]
        %v435 = vld [vmem:[#allocation7 + $0x50] sm:$0xff]
        %v436 = vld [vmem:[#allocation7 + $0x58] sm:$0xff]
        %v437 = vld [vmem:[#allocation7 + $0x60] sm:$0xff]
        %v438 = vld [vmem:[#allocation7 + $0x68] sm:$0xff]
        %v439 = vld [vmem:[#allocation7 + $0x70] sm:$0xff]
        %v440 = vld [vmem:[#allocation7 + $0x78] sm:$0xff]
        %v441 = vld [vmem:[%s3] sm:$0x3]
        %v443 = vlaneseq
        %v444 = vshrl.u32 %v443, 7
        %v445 = vsub.s32 0, %v444
        %v446 = vrot.slane %v441, %v445
        %v447 = vlaneseq
        %v448 = vshrl.u32 %v447, 7
        %v449 = vsub.s32 1, %v448
        %v450 = vrot.slane %v441, %v449
        %v469 = vunpack.c.l.b16 %v425
        %v470 = vunpack.c.h.b16 %v425
        %v471 = vunpack.c.l.b16 %v426
        %v472 = vunpack.c.h.b16 %v426
        %v473 = vunpack.c.l.b16 %v427
        %v474 = vunpack.c.h.b16 %v427
        %v475 = vunpack.c.l.b16 %v428
        %v476 = vunpack.c.h.b16 %v428
        %v477 = vunpack.c.l.b16 %v429
        %v478 = vunpack.c.h.b16 %v429
        %v479 = vunpack.c.l.b16 %v430
        %v480 = vunpack.c.h.b16 %v430
        %v481 = vunpack.c.l.b16 %v431
        %v482 = vunpack.c.h.b16 %v431
        %v483 = vunpack.c.l.b16 %v432
        %v484 = vunpack.c.h.b16 %v432
        %v485 = vunpack.c.l.b16 %v433
        %v486 = vunpack.c.h.b16 %v433
        %v487 = vunpack.c.l.b16 %v434
        %v488 = vunpack.c.h.b16 %v434
        %v489 = vunpack.c.l.b16 %v435
        %v490 = vunpack.c.h.b16 %v435
        %v491 = vunpack.c.l.b16 %v436
        %v492 = vunpack.c.h.b16 %v436
        %v493 = vunpack.c.l.b16 %v437
        %v494 = vunpack.c.h.b16 %v437
        %v495 = vunpack.c.l.b16 %v438
        %v496 = vunpack.c.h.b16 %v438
        %v497 = vunpack.c.l.b16 %v439
        %v498 = vunpack.c.h.b16 %v439
        %v499 = vunpack.c.l.b16 %v440
        %v500 = vunpack.c.h.b16 %v440
        %v501 = vpack.c.b16 %v471, %v469
        %v502 = vpack.c.b16 %v472, %v470
        %v503 = vpack.c.b16 %v475, %v473
        %v504 = vpack.c.b16 %v476, %v474
        %v505 = vpack.c.b16 %v479, %v477
        %v506 = vpack.c.b16 %v480, %v478
        %v507 = vpack.c.b16 %v483, %v481
        %v508 = vpack.c.b16 %v484, %v482
        %v509 = vpack.c.b16 %v487, %v485
        %v510 = vpack.c.b16 %v488, %v486
        %v511 = vpack.c.b16 %v491, %v489
        %v512 = vpack.c.b16 %v492, %v490
        %v513 = vpack.c.b16 %v495, %v493
        %v514 = vpack.c.b16 %v496, %v494
        %v515 = vpack.c.b16 %v499, %v497
        %v516 = vpack.c.b16 %v500, %v498
        %533 = vmatprep.subr.bf16.mxu0 %v502
        %534 = vmatpush1.bf16.msra.mxu0 %v501
        %535 = vmatprep.subr.bf16.mxu0 %v504
        %536 = vmatpush1.bf16.msra.mxu0 %v503
        %537 = vmatprep.subr.bf16.mxu0 %v506
        %538 = vmatpush1.bf16.msra.mxu0 %v505
        %539 = vmatprep.subr.bf16.mxu0 %v508
        %540 = vmatpush1.bf16.msra.mxu0 %v507
        %541 = vmatprep.subr.bf16.mxu0 %v510
        %542 = vmatpush1.bf16.msra.mxu0 %v509
        %543 = vmatprep.subr.bf16.mxu0 %v512
        %544 = vmatpush1.bf16.msra.mxu0 %v511
        %545 = vmatprep.subr.bf16.mxu0 %v514
        %546 = vmatpush1.bf16.msra.mxu0 %v513
        %547 = vmatprep.subr.bf16.mxu0 %v516
        %548 = vmatpush1.bf16.msra.mxu0 %v515
        %549 = vmatprep.subr.bf16.mxu0 0
        %550 = vmatpush1.bf16.msra.mxu0 0
        %551 = vmatprep.subr.bf16.mxu0 0
        %552 = vmatpush1.bf16.msra.mxu0 0
        %553 = vmatprep.subr.bf16.mxu0 0
        %554 = vmatpush1.bf16.msra.mxu0 0
        %555 = vmatprep.subr.bf16.mxu0 0
        %556 = vmatpush1.bf16.msra.mxu0 0
        %557 = vmatprep.subr.bf16.mxu0 0
        %558 = vmatpush1.bf16.msra.mxu0 0
        %559 = vmatprep.subr.bf16.mxu0 0
        %560 = vmatpush1.bf16.msra.mxu0 0
        %561 = vmatprep.subr.bf16.mxu0 0
        %562 = vmatpush1.bf16.msra.mxu0 0
        %563 = vmatprep.subr.bf16.mxu0 0
        %564 = vmatpush1.bf16.msra.mxu0 0
        %565 = vmatprep.mubr.bf16.mxu0 0
        %566 = vmatmul.mubr.bf16.gmra.mrb[0].mxu0 %v423
        %v567 = vpop.f32.mrb[0].mxu0
        %v568 = vadd.f32 %v446, %v567
        %v569 = vpop.f32.mrb[0].mxu0
        %v570 = vadd.f32 %v450, %v569
        %v571 = vpop.f32.mrb[0].mxu0
        %v572 = vadd.f32 %v446, %v571
        %v573 = vpop.f32.mrb[0].mxu0
        %v574 = vadd.f32 %v450, %v573
        %575 = vdwg.mxu0
        %v576 = vld [vmem:[#allocation8] sm:$0xf]
        %v577 = vld [vmem:[#allocation8 + $0x4] sm:$0xf]
        %v578 = vld [vmem:[#allocation8 + $0x8] sm:$0xf]
        %v579 = vld [vmem:[#allocation8 + $0xc] sm:$0xf]
        %v580 = vld [vmem:[#allocation8 + $0x10] sm:$0xf]
        %v581 = vld [vmem:[#allocation8 + $0x14] sm:$0xf]
        %v582 = vld [vmem:[#allocation8 + $0x18] sm:$0xf]
        %v583 = vld [vmem:[#allocation8 + $0x1c] sm:$0xf]
        %v584 = vld [vmem:[#allocation8 + $0x20] sm:$0xf]
        %v585 = vld [vmem:[#allocation8 + $0x24] sm:$0xf]
        %v586 = vld [vmem:[#allocation8 + $0x28] sm:$0xf]
        %v587 = vld [vmem:[#allocation8 + $0x2c] sm:$0xf]
        %v588 = vld [vmem:[#allocation8 + $0x30] sm:$0xf]
        %v589 = vld [vmem:[#allocation8 + $0x34] sm:$0xf]
        %v590 = vld [vmem:[#allocation8 + $0x38] sm:$0xf]
        %v591 = vld [vmem:[#allocation8 + $0x3c] sm:$0xf]
        %v592 = vld [vmem:[%s5] sm:$0x1]
        %v594 = vlaneseq
        %v595 = vshrl.u32 %v594, 7
        %v596 = vsub.s32 0, %v595
        %v597 = vrot.slane %v592, %v596
        %v615 = vunpack.c.l.b16 %v576
        %v616 = vunpack.c.l.b16 %v577
        %v617 = vunpack.c.l.b16 %v578
        %v618 = vunpack.c.l.b16 %v579
        %v619 = vunpack.c.l.b16 %v580
        %v620 = vunpack.c.l.b16 %v581
        %v621 = vunpack.c.l.b16 %v582
        %v622 = vunpack.c.l.b16 %v583
        %v623 = vunpack.c.l.b16 %v584
        %v624 = vunpack.c.l.b16 %v585
        %v625 = vunpack.c.l.b16 %v586
        %v626 = vunpack.c.l.b16 %v587
        %v627 = vunpack.c.l.b16 %v588
        %v628 = vunpack.c.l.b16 %v589
        %v629 = vunpack.c.l.b16 %v590
        %v630 = vunpack.c.l.b16 %v591
        %v631 = vpack.c.b16 %v616, %v615
        %v632 = vpack.c.b16 %v618, %v617
        %v633 = vpack.c.b16 %v620, %v619
        %v634 = vpack.c.b16 %v622, %v621
        %v635 = vpack.c.b16 %v624, %v623
        %v636 = vpack.c.b16 %v626, %v625
        %v637 = vpack.c.b16 %v628, %v627
        %v638 = vpack.c.b16 %v630, %v629
        %647 = vmatprep.subr.bf16.mxu0 0
        %648 = vmatpush1.bf16.msra.mxu0 %v631
        %649 = vmatprep.subr.bf16.mxu0 0
        %650 = vmatpush1.bf16.msra.mxu0 %v632
        %651 = vmatprep.subr.bf16.mxu0 0
        %652 = vmatpush1.bf16.msra.mxu0 %v633
        %653 = vmatprep.subr.bf16.mxu0 0
        %654 = vmatpush1.bf16.msra.mxu0 %v634
        %655 = vmatprep.subr.bf16.mxu0 0
        %656 = vmatpush1.bf16.msra.mxu0 %v635
        %657 = vmatprep.subr.bf16.mxu0 0
        %658 = vmatpush1.bf16.msra.mxu0 %v636
        %659 = vmatprep.subr.bf16.mxu0 0
        %660 = vmatpush1.bf16.msra.mxu0 %v637
        %661 = vmatprep.subr.bf16.mxu0 0
        %662 = vmatpush1.bf16.msra.mxu0 %v638
        %663 = vmatprep.subr.bf16.mxu0 0
        %664 = vmatpush1.bf16.msra.mxu0 0
        %665 = vmatprep.subr.bf16.mxu0 0
        %666 = vmatpush1.bf16.msra.mxu0 0
        %667 = vmatprep.subr.bf16.mxu0 0
        %668 = vmatpush1.bf16.msra.mxu0 0
        %669 = vmatprep.subr.bf16.mxu0 0
        %670 = vmatpush1.bf16.msra.mxu0 0
        %671 = vmatprep.subr.bf16.mxu0 0
        %672 = vmatpush1.bf16.msra.mxu0 0
        %673 = vmatprep.subr.bf16.mxu0 0
        %674 = vmatpush1.bf16.msra.mxu0 0
        %675 = vmatprep.subr.bf16.mxu0 0
        %676 = vmatpush1.bf16.msra.mxu0 0
        %677 = vmatprep.subr.bf16.mxu0 0
        %678 = vmatpush1.bf16.msra.mxu0 0
        %679 = vmatprep.mubr.bf16.mxu0 0
        %680 = vmatmul.mubr.bf16.gmra.mrb[0].mxu0 %v424
        %v681 = vpop.f32.mrb[0].mxu0
        %v682 = vadd.f32 %v597, %v681
        %v683 = vpop.f32.mrb[0].mxu0
        %v684 = vpop.f32.mrb[0].mxu0
        %v685 = vadd.f32 %v597, %v684
        %v686 = vpop.f32.mrb[0].mxu0
        %687 = vdwg.mxu0
        %v688 = vpack.c.bf16 %v572, %v568
        %v690 = vunpack.c.l.b16 %v688
        %v691 = vunpack.c.h.b16 %v688
        %v692 = vpack.c.b16 %v690, %v690
        %v693 = vpack.c.b16 %v691, %v691
        %696 = vst [vmem:[%s396] sm:$0xf] %v692
        %697 = vst [vmem:[%s396 + $0x4] sm:$0xf] %v693
        %v698 = vpack.c.bf16 %v574, %v570
        %v700 = vunpack.c.l.b16 %v698
        %v701 = vunpack.c.h.b16 %v698
        %v702 = vpack.c.b16 %v700, %v700
        %v703 = vpack.c.b16 %v701, %v701
        %706 = vst [vmem:[%s403] sm:$0xf] %v702
        %707 = vst [vmem:[%s403 + $0x4] sm:$0xf] %v703
        %v708 = vpack.c.bf16 %v685, %v682
        %v710 = vunpack.c.l.b16 %v708
        %v711 = vunpack.c.h.b16 %v708
        %v712 = vpack.c.b16 %v710, %v710
        %v713 = vpack.c.b16 %v711, %v711
        %716 = vst [vmem:[%s410] sm:$0xf] %v712
        %717 = vst [vmem:[%s410 + $0x4] sm:$0xf] %v713
        %s718 = sand.u32 %s177, 1
        %s719 = scalar_lea.sflag [#allocation4], %s718
        %s720 = sand.u32 %s177, 1
        %s721 = smul.addr %s720, 8
        %s722 = scalar_lea.vmem [#allocation10], %s721
        %s723 = sand.u32 %s33, 1
        %s724 = scalar_lea.sflag [#allocation12], %s723
        %s725 = sand.u32 %s203, 1
        %s726 = smul.addr %s725, 8
        %s727 = scalar_lea.vmem [#allocation11], %s726
        %s728 = sand.u32 %s33, 1
        %s729 = scalar_lea.sflag [#allocation12], %s728
        %s730 = sand.u32 %s229, 1
        %s731 = smul.addr %s730, 8
        %s732 = scalar_lea.vmem [#allocation13], %s731
        // Predicated region
        $region61: #{tpu_custom_call.1} parent=43 // pred_check
          %p733 = pneg %p187
        $region62: #{tpu_custom_call.1} parent=43 // pred_check_branch
          %735 = sbr.rel (%p733) target = $region64
        $region63: #{tpu_custom_call.1} parent=43 // pred_region
          %s736 = smul.u32 2, %s33
          %s738 = ssub.s32 128, 128
          %739 = vsyncadd %s719, %s738
          %s740 = smul.addr %s736, 64
          %s741 = scalar_lea.hbm %s6, %s740
          %s742 = sshll.u32 %s722, 4
          %s743 = int_to_ptr.vmem [resolvable:$true] %s742
          %748 = dma.vmem_to_hbm [thread:$0]  %s743, 128, %s741, %s719, 64, 64, 4
        $region64: #{tpu_custom_call.1} parent=43 // pred_fallthru
          _
        // Predicated region
        $region65: #{tpu_custom_call.1} parent=43 // pred_check
          %p749 = pneg %p213
        $region66: #{tpu_custom_call.1} parent=43 // pred_check_branch
          %751 = sbr.rel (%p749) target = $region68
        $region67: #{tpu_custom_call.1} parent=43 // pred_region
          %s752 = smul.u32 2, %s33
          %s754 = ssub.s32 128, 128
          %755 = vsyncadd %s724, %s754
          %s756 = smul.addr %s752, 64
          %s757 = scalar_lea.hbm %s7, %s756
          %s758 = sshll.u32 %s727, 4
          %s759 = int_to_ptr.vmem [resolvable:$true] %s758
          %764 = dma.vmem_to_hbm [thread:$0]  %s759, 128, %s757, %s724, 64, 64, 4
        $region68: #{tpu_custom_call.1} parent=43 // pred_fallthru
          _
        // Predicated region
        $region69: #{tpu_custom_call.1} parent=43 // pred_check
          %p765 = pneg %p239
        $region70: #{tpu_custom_call.1} parent=43 // pred_check_branch
          %767 = sbr.rel (%p765) target = $region72
        $region71: #{tpu_custom_call.1} parent=43 // pred_region
          %s768 = smul.u32 2, %s33
          %s770 = ssub.s32 128, 128
          %771 = vsyncadd %s729, %s770
          %s772 = smul.addr %s768, 64
          %s773 = scalar_lea.hbm %s8, %s772
          %s774 = sshll.u32 %s732, 4
          %s775 = int_to_ptr.vmem [resolvable:$true] %s774
          %780 = dma.vmem_to_hbm [thread:$0]  %s775, 128, %s773, %s729, 64, 64, 4
        $region72: #{tpu_custom_call.1} parent=43 // pred_fallthru
          _
      $region44: #{tpu_custom_call.1} parent=5 // pred_fallthru
        _
      %p781 = scmp.le.s32.totalorder 2, %s28
      // Predicated region
      $region73: #{tpu_custom_call.1} parent=5 // pred_check
        %p782 = pneg %p781
      $region74: #{tpu_custom_call.1} parent=5 // pred_check_branch
        %784 = sbr.rel (%p782) target = $region76
      $region75: #{tpu_custom_call.1} parent=5 // pred_region
        %s785 = ssub.s32 %s28, 2
        // Predicated region
        $region77: #{tpu_custom_call.1} parent=75 // pred_check
          %p786 = pneg %p193
        $region78: #{tpu_custom_call.1} parent=75 // pred_check_branch
          %788 = sbr.rel (%p786) target = $region80
        $region79: #{tpu_custom_call.1} parent=75 // pred_region
          %s789 = sand.u32 %s178, 1
          %s790 = scalar_lea.sflag [#allocation4], %s789
          %s791 = sand.u32 %s178, 1
          %s792 = smul.addr %s791, 8
          %s793 = scalar_lea.vmem [#allocation10], %s792
          %794 = dma.done %s790, 128
        $region80: #{tpu_custom_call.1} parent=75 // pred_fallthru
          _
        // Predicated region
        $region81: #{tpu_custom_call.1} parent=75 // pred_check
          %p795 = pneg %p219
        $region82: #{tpu_custom_call.1} parent=75 // pred_check_branch
          %797 = sbr.rel (%p795) target = $region84
        $region83: #{tpu_custom_call.1} parent=75 // pred_region
          %s798 = sand.u32 %s34, 1
          %s799 = scalar_lea.sflag [#allocation12], %s798
          %s800 = sand.u32 %s204, 1
          %s801 = smul.addr %s800, 8
          %s802 = scalar_lea.vmem [#allocation11], %s801
          %803 = dma.done %s799, 128
        $region84: #{tpu_custom_call.1} parent=75 // pred_fallthru
          _
        // Predicated region
        $region85: #{tpu_custom_call.1} parent=75 // pred_check
          %p804 = pneg %p245
        $region86: #{tpu_custom_call.1} parent=75 // pred_check_branch
          %806 = sbr.rel (%p804) target = $region88
        $region87: #{tpu_custom_call.1} parent=75 // pred_region
          %s807 = sand.u32 %s34, 1
          %s808 = scalar_lea.sflag [#allocation12], %s807
          %s809 = sand.u32 %s230, 1
          %s810 = smul.addr %s809, 8
          %s811 = scalar_lea.vmem [#allocation13], %s810
          %812 = dma.done %s808, 128
        $region88: #{tpu_custom_call.1} parent=75 // pred_fallthru
          _
      $region76: #{tpu_custom_call.1} parent=5 // pred_fallthru
        _
    $region6: #{tpu_custom_call.1} parent=1 // loop_footer
      %s32 = sadd.s32 1, %s28
    $region7: #{tpu_custom_call.1} parent=1 // loop_footer_branch
      %27 = sbr.rel target = $region3
    $region8: #{tpu_custom_call.1} parent=1 // loop_exit
      _
    %813 = vsyncpa [#allocation3], 1
    %s814 = scalar_lea.sflag [#allocation3], 1
    %815 = vsyncpa %s814, 1
    %816 = vsyncpa [#allocation6], 1
    %s817 = scalar_lea.sflag [#allocation6], 1
    %818 = vsyncpa %s817, 1
    %819 = vsyncpa [#allocation9], 1
    %820 = vsyncpa [#allocation4], 1
    %s821 = scalar_lea.sflag [#allocation4], 1
    %822 = vsyncpa %s821, 1
    %823 = vsyncpa [#allocation12], 1
    %s824 = scalar_lea.sflag [#allocation12], 1
    %825 = vsyncpa %s824, 1

</llo_original>
